<compile_context>
chip_gen: v6e
topology: v6e:2x2x1
jax: 0.10.0
libtpu: 0.0.40
codegen_flags: <defaults>
</compile_context>

<pallas_src>
import numpy as np
import jax
import jax.numpy as jnp
from jax import lax
from jax.experimental import pallas as pl
from jax.experimental.pallas import tpu as pltpu

LOG_2PI = float(np.log(2.0 * np.pi))


def gmvae_kernel(mu_ref, logvar_ref, eps_ref, rhs_ref, bias_ref,
                 z_ref, logit_ref, qy_ref, ind_ref):
    mu = mu_ref[...]          # (TB, D)
    logvar = logvar_ref[...]  # (TB, D)
    eps = eps_ref[...]        # (TB, D)

    # ---- _infer_latent (is_featExtract=False, weight=1) ----
    # std = exp(0.5*logvar): one EUP op instead of exp + sqrt.
    z = mu + eps * jnp.exp(0.5 * logvar)
    z_ref[...] = z.astype(z_ref.dtype)

    # ---- approx_q_y / log_gauss (eq. 13), single fused MXU matmul ----
    #   logits[b,k] = [z^2, z]_b · [-0.5*inv_var_k, mu_k*inv_var_k] + bias_k
    zf = z.astype(jnp.float32)
    lhs = jnp.concatenate([zf * zf, zf], axis=1)          # (TB, 2D)
    contract = (((1,), (1,)), ((), ()))                   # contract D axes
    logits = lax.dot_general(lhs, rhs_ref[...], contract,
                             preferred_element_type=jnp.float32,
                             precision=lax.Precision.HIGHEST)   # (TB, K)
    logits = logits + bias_ref[...]                       # (1, K) broadcast
    logit_ref[...] = logits.astype(logit_ref.dtype)

    # ---- softmax over classes (row max computed once, reused by argmax) ----
    m = jnp.max(logits, axis=1, keepdims=True)
    e = jnp.exp(logits - m)
    denom = jnp.sum(e, axis=1, keepdims=True)
    qy_ref[...] = (e / denom).astype(qy_ref.dtype)        # exact normalization

    # ---- argmax (first max index, matching torch.max semantics) ----
    K = logits.shape[1]
    iota_k = lax.broadcasted_iota(jnp.int32, logits.shape, 1)
    masked = jnp.where(logits == m, iota_k, jnp.int32(K))
    ind_ref[...] = jnp.min(masked, axis=1, keepdims=True).astype(ind_ref.dtype)


def _round_up(x, m):
    return ((x + m - 1) // m) * m


def base_gmvae_infer(mu, logvar, eps, mu_lookup, logvar_lookup, *, block_b=2048):
    """Fused _infer_latent + _infer_class.

    Returns (mu, logvar, z, log_q_y_logit, q_y, ind)."""
    B, D = mu.shape
    K = mu_lookup.shape[0]

    # ---- one-time LUT math, hoisted out of the per-step kernel body ----
    inv_var = jnp.exp(-logvar_lookup.astype(jnp.float32))            # (K, D)
    a = mu_lookup.astype(jnp.float32) * inv_var                      # (K, D)
    rhs = jnp.concatenate([-0.5 * inv_var, a], axis=1)               # (K, 2D)
    c_k = jnp.sum(mu_lookup * a + logvar_lookup + LOG_2PI, axis=1)   # (K,)
    bias = (-0.5 * c_k + jnp.log(1.0 / K)).reshape(1, K).astype(jnp.float32)

    # ---- batch tile selection: no padding, ragged last block is masked ----
    if B <= 8:
        tb = B                      # full-extent block, no (8,128) constraint
    elif B <= block_b:
        # >= 2 grid steps so the "parallel" axis shards across both v7x TCs.
        tb = min(_round_up(pl.cdiv(B, 2), 8), _round_up(B, 8))
    else:
        tb = block_b
    nb = pl.cdiv(B, tb)

    out_shapes = (
        jax.ShapeDtypeStruct((B, D), jnp.float32),   # z
        jax.ShapeDtypeStruct((B, K), jnp.float32),   # log_q_y_logit
        jax.ShapeDtypeStruct((B, K), jnp.float32),   # q_y
        jax.ShapeDtypeStruct((B, 1), jnp.int32),     # ind
    )

    z, logit, qy, ind = pl.pallas_call(
        gmvae_kernel,
        out_shape=out_shapes,
        grid=(nb,),
        in_specs=[
            pl.BlockSpec((tb, D), lambda i: (i, 0)),
            pl.BlockSpec((tb, D), lambda i: (i, 0)),
            pl.BlockSpec((tb, D), lambda i: (i, 0)),
            pl.BlockSpec((K, 2 * D), lambda i: (0, 0)),
            pl.BlockSpec((1, K), lambda i: (0, 0)),
        ],
        out_specs=(
            pl.BlockSpec((tb, D), lambda i: (i, 0)),
            pl.BlockSpec((tb, K), lambda i: (i, 0)),
            pl.BlockSpec((tb, K), lambda i: (i, 0)),
            pl.BlockSpec((tb, 1), lambda i: (i, 0)),
        ),
        compiler_params=pltpu.CompilerParams(
            dimension_semantics=("parallel",),
            vmem_limit_bytes=48 * 1024 * 1024),
    )(mu, logvar, eps, rhs, bias)

    return mu, logvar, z, logit, qy, ind[:, 0]


def reference(mu, logvar, eps, mu_lookup, logvar_lookup):
    """Pure-JAX reference mirroring the PyTorch code exactly."""
    K = mu_lookup.shape[0]
    sigma = jnp.sqrt(jnp.exp(logvar))
    z = mu + sigma * eps
    diff = z[:, None, :] - mu_lookup[None, :, :]
    lv = logvar_lookup[None, :, :]
    llh = -0.5 * (diff ** 2 / jnp.exp(lv) + lv + LOG_2PI)
    logits = jnp.sum(llh, axis=2) + jnp.log(1.0 / K)
    q_y = jax.nn.softmax(logits, axis=1)
    ind = jnp.argmax(q_y, axis=1).astype(jnp.int32)
    return z, logits, q_y, ind


def _check(B, D, K, seed):
    key = jax.random.PRNGKey(seed)
    k_mu, k_lv, k_eps, k_lut = jax.random.split(key, 4)

    # Encoder outputs (synthetic, since _encode is abstract).
    mu = jax.random.normal(k_mu, (B, D), dtype=jnp.float32)
    logvar = 0.1 * jax.random.normal(k_lv, (B, D), dtype=jnp.float32)
    # Reparameterization noise (torch.distributions.Normal(0,1).sample()).
    eps = jax.random.normal(k_eps, (B, D), dtype=jnp.float32)

    # _build_mu_lookup: Xavier-uniform init on an (n_class, latent_dim) embedding.
    bound = float(np.sqrt(6.0 / (K + D)))
    mu_lookup = jax.random.uniform(k_lut, (K, D), dtype=jnp.float32,
                                   minval=-bound, maxval=bound)
    # _build_logvar_lookup: constant init, log(exp(0)^2) = 0.
    logvar_lookup = jnp.zeros((K, D), dtype=jnp.float32)

    out = base_gmvae_infer(mu, logvar, eps, mu_lookup, logvar_lookup)
    out = jax.block_until_ready(out)
    _, _, z, logit, q_y, ind = out

    z_r, logit_r, qy_r, ind_r = reference(mu, logvar, eps, mu_lookup, logvar_lookup)
    np.testing.assert_allclose(np.asarray(z), np.asarray(z_r), rtol=1e-5, atol=1e-5)
    np.testing.assert_allclose(np.asarray(logit), np.asarray(logit_r),
                               rtol=1e-4, atol=1e-4)
    np.testing.assert_allclose(np.asarray(q_y), np.asarray(qy_r),
                               rtol=1e-4, atol=1e-5)
    np.testing.assert_array_equal(np.asarray(ind), np.asarray(ind_r))


if __name__ == "__main__":
    # Small shapes consistent with the module: latent_dim=32, n_class=10.
    _check(B=8, D=32, K=10, seed=0)    # single full-extent block
    _check(B=20, D=32, K=10, seed=0)   # multi-block grid + ragged last block
    print("KERNEL_OK")
</pallas_src>

<mosaic_0001>
module attributes {stable_mosaic.version = 11 : i64} {
  func.func @gmvae_kernel(%arg0: i32, %arg1: memref<8x32xf32, #tpu.memory_space<vmem>>, %arg2: memref<8x32xf32, #tpu.memory_space<vmem>>, %arg3: memref<8x32xf32, #tpu.memory_space<vmem>>, %arg4: memref<10x64xf32, #tpu.memory_space<vmem>>, %arg5: memref<1x10xf32, #tpu.memory_space<vmem>>, %arg6: memref<8x32xf32, #tpu.memory_space<vmem>>, %arg7: memref<8x10xf32, #tpu.memory_space<vmem>>, %arg8: memref<8x10xf32, #tpu.memory_space<vmem>>, %arg9: memref<8x1xi32, #tpu.memory_space<vmem>>) attributes {dimension_semantics = [#tpu.dimension_semantics<parallel>], iteration_bounds = array<i64: 1>, scalar_prefetch = 0 : i64, scratch_operands = 0 : i64, tpu.core_type = #tpu.core_type<tc>, window_params = [{transform_indices = @transform_0, window_bounds = array<i64: 8, 32>}, {transform_indices = @transform_1, window_bounds = array<i64: 8, 32>}, {transform_indices = @transform_2, window_bounds = array<i64: 8, 32>}, {pipeline_mode = #tpu.pipeline_mode<synchronous>, transform_indices = @transform_3, window_bounds = array<i64: 10, 64>}, {pipeline_mode = #tpu.pipeline_mode<synchronous>, transform_indices = @transform_4, window_bounds = array<i64: 1, 10>}, {transform_indices = @transform_5, window_bounds = array<i64: 8, 32>}, {transform_indices = @transform_6, window_bounds = array<i64: 8, 10>}, {transform_indices = @transform_7, window_bounds = array<i64: 8, 10>}, {transform_indices = @transform_8, window_bounds = array<i64: 8, 1>}]} {
    %c0 = arith.constant 0 : index
    %c0_0 = arith.constant 0 : index
    %0 = vector.load %arg1[%c0, %c0_0] : memref<8x32xf32, #tpu.memory_space<vmem>>, vector<8x32xf32>
    %c0_1 = arith.constant 0 : index
    %c0_2 = arith.constant 0 : index
    %1 = vector.load %arg2[%c0_1, %c0_2] : memref<8x32xf32, #tpu.memory_space<vmem>>, vector<8x32xf32>
    %c0_3 = arith.constant 0 : index
    %c0_4 = arith.constant 0 : index
    %2 = vector.load %arg3[%c0_3, %c0_4] : memref<8x32xf32, #tpu.memory_space<vmem>>, vector<8x32xf32>
    %cst = arith.constant 5.000000e-01 : f32
    %3 = vector.broadcast %cst : f32 to vector<8x32xf32>
    %4 = arith.mulf %3, %1 : vector<8x32xf32>
    %5 = math.exp %4 : vector<8x32xf32>
    %6 = arith.mulf %2, %5 : vector<8x32xf32>
    %7 = arith.addf %0, %6 : vector<8x32xf32>
    %c0_5 = arith.constant 0 : index
    %c0_6 = arith.constant 0 : index
    %8 = vector.load %arg6[%c0_5, %c0_6] : memref<8x32xf32, #tpu.memory_space<vmem>>, vector<8x32xf32>
    tpu.vector_store %arg6[%c0_5, %c0_6], %7 {strides = array<i32>} : memref<8x32xf32, #tpu.memory_space<vmem>>, vector<8x32xf32>,
    %9 = arith.mulf %7, %7 : vector<8x32xf32>
    %10 = tpu.concatenate %9, %7 in 1 : vector<8x32xf32>, vector<8x32xf32> -> vector<8x64xf32>
    %c0_7 = arith.constant 0 : index
    %c0_8 = arith.constant 0 : index
    %11 = vector.load %arg4[%c0_7, %c0_8] : memref<10x64xf32, #tpu.memory_space<vmem>>, vector<10x64xf32>
    %cst_9 = arith.constant dense<0.000000e+00> : vector<8x10xf32>
    %12 = tpu.matmul %10, %11, %cst_9 {dimension_numbers = #tpu.dot_dimension_numbers<[1], [1], [0], [0], [0, 0, 1, 0], [], []>, precision = #tpu.contract_precision<fp32>} : vector<8x64xf32>, vector<10x64xf32>, vector<8x10xf32> -> vector<8x10xf32>
    %c0_10 = arith.constant 0 : index
    %c0_11 = arith.constant 0 : index
    %13 = vector.load %arg5[%c0_10, %c0_11] : memref<1x10xf32, #tpu.memory_space<vmem>>, vector<1x10xf32>
    %14 = vector.broadcast %13 : vector<1x10xf32> to vector<8x10xf32>
    %15 = arith.addf %12, %14 : vector<8x10xf32>
    %c0_12 = arith.constant 0 : index
    %c0_13 = arith.constant 0 : index
    %16 = vector.load %arg7[%c0_12, %c0_13] : memref<8x10xf32, #tpu.memory_space<vmem>>, vector<8x10xf32>
    tpu.vector_store %arg7[%c0_12, %c0_13], %15 {strides = array<i32>} : memref<8x10xf32, #tpu.memory_space<vmem>>, vector<8x10xf32>,
    %cst_14 = arith.constant dense<0xFF800000> : vector<8xf32>
    %17 = vector.multi_reduction <maximumf>, %15, %cst_14 [1] : vector<8x10xf32> to vector<8xf32>
    %18 = vector.shape_cast %17 : vector<8xf32> to vector<8x1xf32>
    %19 = vector.broadcast %18 : vector<8x1xf32> to vector<8x10xf32>
    %20 = arith.subf %15, %19 : vector<8x10xf32>
    %21 = math.exp %20 : vector<8x10xf32>
    %cst_15 = arith.constant dense<0.000000e+00> : vector<8xf32>
    %22 = vector.multi_reduction <add>, %21, %cst_15 [1] : vector<8x10xf32> to vector<8xf32>
    %23 = vector.shape_cast %22 : vector<8xf32> to vector<8x1xf32>
    %24 = vector.broadcast %23 : vector<8x1xf32> to vector<8x10xf32>
    %25 = arith.divf %21, %24 : vector<8x10xf32>
    %c0_16 = arith.constant 0 : index
    %c0_17 = arith.constant 0 : index
    %26 = vector.load %arg8[%c0_16, %c0_17] : memref<8x10xf32, #tpu.memory_space<vmem>>, vector<8x10xf32>
    tpu.vector_store %arg8[%c0_16, %c0_17], %25 {strides = array<i32>} : memref<8x10xf32, #tpu.memory_space<vmem>>, vector<8x10xf32>,
    %27 = tpu.iota {dimensions = array<i32: 1>} : vector<8x10xi32>
    %28 = vector.broadcast %18 : vector<8x1xf32> to vector<8x10xf32>
    %29 = arith.cmpf oeq, %15, %28 : vector<8x10xf32>
    %c10_i32 = arith.constant 10 : i32
    %30 = vector.broadcast %c10_i32 : i32 to vector<8x10xi32>
    %31 = arith.select %29, %27, %30 : vector<8x10xi1>, vector<8x10xi32>
    %cst_18 = arith.constant dense<2147483647> : vector<8xi32>
    %32 = vector.multi_reduction <minsi>, %31, %cst_18 [1] : vector<8x10xi32> to vector<8xi32>
    %33 = vector.shape_cast %32 : vector<8xi32> to vector<8x1xi32>
    %c0_19 = arith.constant 0 : index
    %c0_20 = arith.constant 0 : index
    %34 = vector.load %arg9[%c0_19, %c0_20] : memref<8x1xi32, #tpu.memory_space<vmem>>, vector<8x1xi32>
    tpu.vector_store %arg9[%c0_19, %c0_20], %33 {strides = array<i32>} : memref<8x1xi32, #tpu.memory_space<vmem>>, vector<8x1xi32>,
    return
  }
  func.func @transform_0(%arg0: i32) -> (i32, i32) {
    %c0_i32 = arith.constant 0 : i32
    %c0_i32_0 = arith.constant 0 : i32
    return %arg0, %c0_i32 : i32, i32
  }
  func.func @transform_1(%arg0: i32) -> (i32, i32) {
    %c0_i32 = arith.constant 0 : i32
    %c0_i32_0 = arith.constant 0 : i32
    return %arg0, %c0_i32 : i32, i32
  }
  func.func @transform_2(%arg0: i32) -> (i32, i32) {
    %c0_i32 = arith.constant 0 : i32
    %c0_i32_0 = arith.constant 0 : i32
    return %arg0, %c0_i32 : i32, i32
  }
  func.func @transform_3(%arg0: i32) -> (i32, i32) {
    %c0_i32 = arith.constant 0 : i32
    %c0_i32_0 = arith.constant 0 : i32
    %c0_i32_1 = arith.constant 0 : i32
    return %c0_i32, %c0_i32_0 : i32, i32
  }
  func.func @transform_4(%arg0: i32) -> (i32, i32) {
    %c0_i32 = arith.constant 0 : i32
    %c0_i32_0 = arith.constant 0 : i32
    %c0_i32_1 = arith.constant 0 : i32
    return %c0_i32, %c0_i32_0 : i32, i32
  }
  func.func @transform_5(%arg0: i32) -> (i32, i32) {
    %c0_i32 = arith.constant 0 : i32
    %c0_i32_0 = arith.constant 0 : i32
    return %arg0, %c0_i32 : i32, i32
  }
  func.func @transform_6(%arg0: i32) -> (i32, i32) {
    %c0_i32 = arith.constant 0 : i32
    %c0_i32_0 = arith.constant 0 : i32
    return %arg0, %c0_i32 : i32, i32
  }
  func.func @transform_7(%arg0: i32) -> (i32, i32) {
    %c0_i32 = arith.constant 0 : i32
    %c0_i32_0 = arith.constant 0 : i32
    return %arg0, %c0_i32 : i32, i32
  }
  func.func @transform_8(%arg0: i32) -> (i32, i32) {
    %c0_i32 = arith.constant 0 : i32
    %c0_i32_0 = arith.constant 0 : i32
    return %arg0, %c0_i32 : i32, i32
  }
}

</mosaic_0001>

<llo_original>
// kernel: tpu_custom_call.1
$region0: #{tpu_custom_call.1}
  #allocation0 [shape = 'u32[]', space=smem, size = 0x4, offset = 0x4, fixed_abs, tag = 'smem constant byte address 0x4 - core index']
  #allocation1 [shape = 'u32[144,128]{1,0:T(1,128)}', space=vmem, size = 0x12000, scoped, tag = 'internal scratch']
  %s0 = inlined_call_operand.hbm [shape: f32[8,32], index: 0, kind: input, shape index: {}]
  %s1 = inlined_call_operand.hbm [shape: f32[8,32], index: 1, kind: input, shape index: {}]
  %s2 = inlined_call_operand.hbm [shape: f32[8,32], index: 2, kind: input, shape index: {}]
  %s3 = inlined_call_operand.hbm [shape: f32[10,64], index: 3, kind: input, shape index: {}]
  %s4 = inlined_call_operand.vmem [shape: f32[1,10], index: 4, kind: input, shape index: {}]
  %s5 = inlined_call_operand.hbm [shape: f32[8,32], index: 5, kind: output, shape index: {0}]
  %s6 = inlined_call_operand.hbm [shape: f32[8,10], index: 6, kind: output, shape index: {1}]
  %s7 = inlined_call_operand.hbm [shape: f32[8,10], index: 7, kind: output, shape index: {2}]
  %s8 = inlined_call_operand.vmem [shape: s32[8,1], index: 8, kind: output, shape index: {3}]
  %9 = xla_tuple %s5, %s6, %s7, %s8
  %s10 = sld [smem:[#allocation0]]
  $region70: #{tpu_custom_call.1} parent=0
    _
  %s12 = ssub.s32 1, %s10
  %s13 = scalar_select 0, %s12, %s10
  $region1: #{tpu_custom_call.1} parent=0
    #allocation2 [shape = 'u8[4096]{0}', space=vmem, size = 0x1000, scoped, tag = 'input window, operand 0, single buffered']
    #allocation3 [shape = 's32[1]{0}', space=sflag, size = 0x4, scoped, tag = 'scoped memory for tpu_custom_call.1']
    #allocation4 [shape = 's32[1]{0}', space=sflag, size = 0x4, scoped, tag = 'scoped memory for tpu_custom_call.1']
    #allocation5 [shape = 'u8[4096]{0}', space=vmem, size = 0x1000, scoped, tag = 'input window, operand 1, single buffered']
    #allocation6 [shape = 's32[1]{0}', space=sflag, size = 0x4, scoped, tag = 'scoped memory for tpu_custom_call.1']
    #allocation7 [shape = 'u8[4096]{0}', space=vmem, size = 0x1000, scoped, tag = 'input window, operand 2, single buffered']
    #allocation8 [shape = 'u8[8192]{0}', space=vmem, size = 0x2000, scoped, tag = 'input window, operand 3, single buffered']
    #allocation9 [shape = 's32[1]{0}', space=sflag, size = 0x4, scoped, tag = 'scoped memory for tpu_custom_call.1']
    #allocation10 [shape = 'u8[4096]{0}', space=vmem, size = 0x1000, scoped, tag = 'output window, operand 0, single buffered']
    #allocation11 [shape = 'u8[4096]{0}', space=vmem, size = 0x1000, scoped, tag = 'output window, operand 1, single buffered']
    #allocation12 [shape = 's32[1]{0}', space=sflag, size = 0x4, scoped, tag = 'scoped memory for tpu_custom_call.1']
    #allocation13 [shape = 'u8[4096]{0}', space=vmem, size = 0x1000, scoped, tag = 'output window, operand 2, single buffered']
    %14 = vsyncpa [#allocation3], 0
    %15 = vsyncpa [#allocation6], 0
    %16 = vsyncpa [#allocation9], 0
    %17 = vsyncpa [#allocation4], 0
    %18 = vsyncpa [#allocation12], 0
    // Predicated region
    $region2: #{tpu_custom_call.1} parent=1 // pred_check
      _
    $region3: #{tpu_custom_call.1} parent=1 // pred_check_branch
      %20 = sbr.rel (0) target = $region5
    $region4: #{tpu_custom_call.1} parent=1 // pred_region
      %s22 = ssub.s32 128, 128
      %23 = vsyncadd [#allocation3], %s22
      %s25 = sshll.u32 [#allocation2], 4
      %s26 = int_to_ptr.vmem [resolvable:$true] %s25
      %28 = dma.hbm_to_vmem [thread:$0]  %s0, 128, %s26, [#allocation3]
    $region5: #{tpu_custom_call.1} parent=1 // pred_fallthru
      _
    // Predicated region
    $region6: #{tpu_custom_call.1} parent=1 // pred_check
      _
    $region7: #{tpu_custom_call.1} parent=1 // pred_check_branch
      %30 = sbr.rel (0) target = $region9
    $region8: #{tpu_custom_call.1} parent=1 // pred_region
      %s32 = ssub.s32 128, 128
      %33 = vsyncadd [#allocation6], %s32
      %s35 = sshll.u32 [#allocation5], 4
      %s36 = int_to_ptr.vmem [resolvable:$true] %s35
      %38 = dma.hbm_to_vmem [thread:$0]  %s1, 128, %s36, [#allocation6]
    $region9: #{tpu_custom_call.1} parent=1 // pred_fallthru
      _
    // Predicated region
    $region10: #{tpu_custom_call.1} parent=1 // pred_check
      _
    $region11: #{tpu_custom_call.1} parent=1 // pred_check_branch
      %40 = sbr.rel (0) target = $region13
    $region12: #{tpu_custom_call.1} parent=1 // pred_region
      %s42 = ssub.s32 128, 128
      %43 = vsyncadd [#allocation6], %s42
      %s45 = sshll.u32 [#allocation7], 4
      %s46 = int_to_ptr.vmem [resolvable:$true] %s45
      %48 = dma.hbm_to_vmem [thread:$0]  %s2, 128, %s46, [#allocation6]
    $region13: #{tpu_custom_call.1} parent=1 // pred_fallthru
      _
    // Predicated region
    $region14: #{tpu_custom_call.1} parent=1 // pred_check
      _
    $region15: #{tpu_custom_call.1} parent=1 // pred_check_branch
      %50 = sbr.rel (0) target = $region17
    $region16: #{tpu_custom_call.1} parent=1 // pred_region
      %s52 = ssub.s32 256, 256
      %53 = vsyncadd [#allocation9], %s52
      %s54 = sshll.u32 [#allocation8], 4
      %s55 = int_to_ptr.vmem [resolvable:$true] %s54
      %60 = dma.hbm_to_vmem [thread:$0]  %s3, 256, %s55, [#allocation9], 128, 128, 8
    $region17: #{tpu_custom_call.1} parent=1 // pred_fallthru
      _
    // Predicated region
    $region18: #{tpu_custom_call.1} parent=1 // pred_check
      _
    $region19: #{tpu_custom_call.1} parent=1 // pred_check_branch
      %62 = sbr.rel (0) target = $region21
    $region20: #{tpu_custom_call.1} parent=1 // pred_region
      _
    $region21: #{tpu_custom_call.1} parent=1 // pred_fallthru
      _
    // Predicated region
    $region22: #{tpu_custom_call.1} parent=1 // pred_check
      _
    $region23: #{tpu_custom_call.1} parent=1 // pred_check_branch
      %64 = sbr.rel (0) target = $region25
    $region24: #{tpu_custom_call.1} parent=1 // pred_region
      %65 = dma.done [#allocation3], 128
    $region25: #{tpu_custom_call.1} parent=1 // pred_fallthru
      _
    // Predicated region
    $region26: #{tpu_custom_call.1} parent=1 // pred_check
      _
    $region27: #{tpu_custom_call.1} parent=1 // pred_check_branch
      %67 = sbr.rel (0) target = $region29
    $region28: #{tpu_custom_call.1} parent=1 // pred_region
      %68 = dma.done [#allocation6], 128
    $region29: #{tpu_custom_call.1} parent=1 // pred_fallthru
      _
    // Predicated region
    $region30: #{tpu_custom_call.1} parent=1 // pred_check
      _
    $region31: #{tpu_custom_call.1} parent=1 // pred_check_branch
      %70 = sbr.rel (0) target = $region33
    $region32: #{tpu_custom_call.1} parent=1 // pred_region
      %71 = dma.done [#allocation6], 128
    $region33: #{tpu_custom_call.1} parent=1 // pred_fallthru
      _
    // Predicated region
    $region34: #{tpu_custom_call.1} parent=1 // pred_check
      _
    $region35: #{tpu_custom_call.1} parent=1 // pred_check_branch
      %73 = sbr.rel (0) target = $region37
    $region36: #{tpu_custom_call.1} parent=1 // pred_region
      %74 = dma.done [#allocation9], 256
    $region37: #{tpu_custom_call.1} parent=1 // pred_fallthru
      _
    %v75 = vld [vmem:[#allocation2] sm:$0xff]
    %v76 = vld [vmem:[#allocation5] sm:$0xff]
    %v77 = vld [vmem:[#allocation7] sm:$0xff]
    %v78 = vmul.f32 %v76, 0.5
    %v79 = vmul.f32 %v78, 1.442695
    %v80 = vpow.pop %v79
    %v81 = vmul.f32 %v77, %v80
    %v82 = vadd.f32 %v75, %v81
    %vm83 = vcmask 261120
    %84 = vst.msk [vmem:[#allocation10] sm:$0xff] %vm83, %v82
    %v85 = vmul.f32 %v82, %v82
    %87 = vrot.lane.b32.xlu0 %v82, 32
    %v88 = vpop.permute.xlu0 %87
    %v90 = vsel %vm83, %v85, %v88
    %v91 = vld [vmem:[#allocation8] sm:$0xff]
    %v92 = vld [vmem:[#allocation8 + $0x8] sm:$0x3]
    %v93 = vld [vmem:[%s4] sm:$0x1]
    %v95 = vlaneseq
    %v96 = vshrl.u32 %v95, 7
    %v97 = vsub.s32 0, %v96
    %v98 = vrot.slane %v93, %v97
    %vm100 = vcmask 523264
    %v102 = vsel %vm100, %v90, 0
    %v105 = vsel %vm100, %v91, 0
    %v108 = vsel %vm100, %v92, 0
    %110 = vmatprep.subr.mxu0 0.0
    %111 = vmatpush1.xpose.msra.mxu0 0.0
    %112 = vmatprep.subr.mxu0 0.0
    %113 = vmatpush1.xpose.msra.mxu0 0.0
    %114 = vmatprep.subr.mxu0 0.0
    %115 = vmatpush1.xpose.msra.mxu0 0.0
    %116 = vmatprep.subr.mxu0 0.0
    %117 = vmatpush1.xpose.msra.mxu0 0.0
    %118 = vmatprep.subr.mxu0 0.0
    %119 = vmatpush1.xpose.msra.mxu0 0.0
    %120 = vmatprep.subr.mxu0 0.0
    %121 = vmatpush1.xpose.msra.mxu0 0.0
    %122 = vmatprep.subr.mxu0 0.0
    %123 = vmatpush1.xpose.msra.mxu0 0.0
    %124 = vmatprep.subr.mxu0 0.0
    %125 = vmatpush1.xpose.msra.mxu0 0.0
    %126 = vmatprep.subr.mxu0 0.0
    %127 = vmatpush1.xpose.msra.mxu0 0.0
    %128 = vmatprep.subr.mxu0 0.0
    %129 = vmatpush1.xpose.msra.mxu0 0.0
    %130 = vmatprep.subr.mxu0 0.0
    %131 = vmatpush1.xpose.msra.mxu0 0.0
    %132 = vmatprep.subr.mxu0 0.0
    %133 = vmatpush1.xpose.msra.mxu0 0.0
    %134 = vmatprep.subr.mxu0 0.0
    %135 = vmatpush1.xpose.msra.mxu0 0.0
    %136 = vmatprep.subr.mxu0 0.0
    %137 = vmatpush1.xpose.msra.mxu0 0.0
    %138 = vmatprep.subr.mxu0 0.0
    %v139 = vand.u32 %v108, 4294901760
    %140 = vmatpush1.xpose.msra.mxu0 %v139
    %141 = vmatprep.subr.mxu0 0.0
    %v142 = vand.u32 %v105, 4294901760
    %143 = vmatpush1.xpose.msra.mxu0 %v142
    %144 = vmatprep.subr.mxu0 0.0
    %145 = vmatpush2.xpose.msra.mxu0 0.0
    %146 = vmatprep.subr.mxu0 0.0
    %147 = vmatpush2.xpose.msra.mxu0 0.0
    %148 = vmatprep.subr.mxu0 0.0
    %149 = vmatpush2.xpose.msra.mxu0 0.0
    %150 = vmatprep.subr.mxu0 0.0
    %151 = vmatpush2.xpose.msra.mxu0 0.0
    %152 = vmatprep.subr.mxu0 0.0
    %153 = vmatpush2.xpose.msra.mxu0 0.0
    %154 = vmatprep.subr.mxu0 0.0
    %155 = vmatpush2.xpose.msra.mxu0 0.0
    %156 = vmatprep.subr.mxu0 0.0
    %157 = vmatpush2.xpose.msra.mxu0 0.0
    %158 = vmatprep.subr.mxu0 0.0
    %159 = vmatpush2.xpose.msra.mxu0 0.0
    %160 = vmatprep.subr.mxu0 0.0
    %161 = vmatpush2.xpose.msra.mxu0 0.0
    %162 = vmatprep.subr.mxu0 0.0
    %163 = vmatpush2.xpose.msra.mxu0 0.0
    %164 = vmatprep.subr.mxu0 0.0
    %165 = vmatpush2.xpose.msra.mxu0 0.0
    %166 = vmatprep.subr.mxu0 0.0
    %167 = vmatpush2.xpose.msra.mxu0 0.0
    %168 = vmatprep.subr.mxu0 0.0
    %169 = vmatpush2.xpose.msra.mxu0 0.0
    %170 = vmatprep.subr.mxu0 0.0
    %171 = vmatpush2.xpose.msra.mxu0 0.0
    %172 = vmatprep.subr.mxu0 0.0
    %173 = vmatpush2.xpose.msra.mxu0 0.0
    %174 = vmatprep.subr.mxu0 0.0
    %175 = vmatpush2.xpose.msra.mxu0 0.0
    %176 = vmatprep.mubr.f32.mxu0 0.0
    %v177 = vand.u32 %v102, 4294901760
    %v178 = vsub.f32 %v102, %v177
    %v179 = vand.u32 %v178, 4294901760
    %v180 = vsub.f32 %v178, %v179
    %v181 = vand.u32 %v180, 4294901760
    %182 = vmatmul.mubr.f32.gmra.mxu0 %v181
    %v183 = vpop.f32.mrf.mxu0
    %v184 = vadd.f32 %v98, %v183
    %v185 = vpop.f32.mrf.mxu0
    %186 = vdwg.mxu0
    %187 = vmatprep.subr.mxu0 0.0
    %188 = vmatpush1.xpose.msra.mxu0 0.0
    %189 = vmatprep.subr.mxu0 0.0
    %190 = vmatpush1.xpose.msra.mxu0 0.0
    %191 = vmatprep.subr.mxu0 0.0
    %192 = vmatpush1.xpose.msra.mxu0 0.0
    %193 = vmatprep.subr.mxu0 0.0
    %194 = vmatpush1.xpose.msra.mxu0 0.0
    %195 = vmatprep.subr.mxu0 0.0
    %196 = vmatpush1.xpose.msra.mxu0 0.0
    %197 = vmatprep.subr.mxu0 0.0
    %198 = vmatpush1.xpose.msra.mxu0 0.0
    %199 = vmatprep.subr.mxu0 0.0
    %200 = vmatpush1.xpose.msra.mxu0 0.0
    %201 = vmatprep.subr.mxu0 0.0
    %202 = vmatpush1.xpose.msra.mxu0 0.0
    %203 = vmatprep.subr.mxu0 0.0
    %204 = vmatpush1.xpose.msra.mxu0 0.0
    %205 = vmatprep.subr.mxu0 0.0
    %206 = vmatpush1.xpose.msra.mxu0 0.0
    %207 = vmatprep.subr.mxu0 0.0
    %208 = vmatpush1.xpose.msra.mxu0 0.0
    %209 = vmatprep.subr.mxu0 0.0
    %210 = vmatpush1.xpose.msra.mxu0 0.0
    %211 = vmatprep.subr.mxu0 0.0
    %212 = vmatpush1.xpose.msra.mxu0 0.0
    %213 = vmatprep.subr.mxu0 0.0
    %214 = vmatpush1.xpose.msra.mxu0 0.0
    %215 = vmatprep.subr.mxu0 0.0
    %v216 = vand.u32 %v108, 4294901760
    %v217 = vsub.f32 %v108, %v216
    %v218 = vand.u32 %v217, 4294901760
    %v219 = vsub.f32 %v217, %v218
    %v220 = vand.u32 %v219, 4294901760
    %221 = vmatpush1.xpose.msra.mxu0 %v220
    %222 = vmatprep.subr.mxu0 0.0
    %v223 = vand.u32 %v105, 4294901760
    %v224 = vsub.f32 %v105, %v223
    %v225 = vand.u32 %v224, 4294901760
    %v226 = vsub.f32 %v224, %v225
    %v227 = vand.u32 %v226, 4294901760
    %228 = vmatpush1.xpose.msra.mxu0 %v227
    %229 = vmatprep.subr.mxu0 0.0
    %230 = vmatpush2.xpose.msra.mxu0 0.0
    %231 = vmatprep.subr.mxu0 0.0
    %232 = vmatpush2.xpose.msra.mxu0 0.0
    %233 = vmatprep.subr.mxu0 0.0
    %234 = vmatpush2.xpose.msra.mxu0 0.0
    %235 = vmatprep.subr.mxu0 0.0
    %236 = vmatpush2.xpose.msra.mxu0 0.0
    %237 = vmatprep.subr.mxu0 0.0
    %238 = vmatpush2.xpose.msra.mxu0 0.0
    %239 = vmatprep.subr.mxu0 0.0
    %240 = vmatpush2.xpose.msra.mxu0 0.0
    %241 = vmatprep.subr.mxu0 0.0
    %242 = vmatpush2.xpose.msra.mxu0 0.0
    %243 = vmatprep.subr.mxu0 0.0
    %244 = vmatpush2.xpose.msra.mxu0 0.0
    %245 = vmatprep.subr.mxu0 0.0
    %246 = vmatpush2.xpose.msra.mxu0 0.0
    %247 = vmatprep.subr.mxu0 0.0
    %248 = vmatpush2.xpose.msra.mxu0 0.0
    %249 = vmatprep.subr.mxu0 0.0
    %250 = vmatpush2.xpose.msra.mxu0 0.0
    %251 = vmatprep.subr.mxu0 0.0
    %252 = vmatpush2.xpose.msra.mxu0 0.0
    %253 = vmatprep.subr.mxu0 0.0
    %254 = vmatpush2.xpose.msra.mxu0 0.0
    %255 = vmatprep.subr.mxu0 0.0
    %256 = vmatpush2.xpose.msra.mxu0 0.0
    %257 = vmatprep.subr.mxu0 0.0
    %258 = vmatpush2.xpose.msra.mxu0 0.0
    %259 = vmatprep.subr.mxu0 0.0
    %260 = vmatpush2.xpose.msra.mxu0 0.0
    %261 = vmatprep.mubr.f32.mxu0 0.0
    %v262 = vand.u32 %v102, 4294901760
    %263 = vmatmul.mubr.f32.gmra.mxu0 %v262
    %v264 = vpop.f32.mrf.mxu0
    %v265 = vadd.f32 %v184, %v264
    %v266 = vpop.f32.mrf.mxu0
    %267 = vdwg.mxu0
    %268 = vmatprep.subr.mxu0 0.0
    %269 = vmatpush1.xpose.msra.mxu0 0.0
    %270 = vmatprep.subr.mxu0 0.0
    %271 = vmatpush1.xpose.msra.mxu0 0.0
    %272 = vmatprep.subr.mxu0 0.0
    %273 = vmatpush1.xpose.msra.mxu0 0.0
    %274 = vmatprep.subr.mxu0 0.0
    %275 = vmatpush1.xpose.msra.mxu0 0.0
    %276 = vmatprep.subr.mxu0 0.0
    %277 = vmatpush1.xpose.msra.mxu0 0.0
    %278 = vmatprep.subr.mxu0 0.0
    %279 = vmatpush1.xpose.msra.mxu0 0.0
    %280 = vmatprep.subr.mxu0 0.0
    %281 = vmatpush1.xpose.msra.mxu0 0.0
    %282 = vmatprep.subr.mxu0 0.0
    %283 = vmatpush1.xpose.msra.mxu0 0.0
    %284 = vmatprep.subr.mxu0 0.0
    %285 = vmatpush1.xpose.msra.mxu0 0.0
    %286 = vmatprep.subr.mxu0 0.0
    %287 = vmatpush1.xpose.msra.mxu0 0.0
    %288 = vmatprep.subr.mxu0 0.0
    %289 = vmatpush1.xpose.msra.mxu0 0.0
    %290 = vmatprep.subr.mxu0 0.0
    %291 = vmatpush1.xpose.msra.mxu0 0.0
    %292 = vmatprep.subr.mxu0 0.0
    %293 = vmatpush1.xpose.msra.mxu0 0.0
    %294 = vmatprep.subr.mxu0 0.0
    %295 = vmatpush1.xpose.msra.mxu0 0.0
    %296 = vmatprep.subr.mxu0 0.0
    %v297 = vand.u32 %v108, 4294901760
    %v298 = vsub.f32 %v108, %v297
    %299 = vmatpush1.xpose.msra.mxu0 %v298
    %300 = vmatprep.subr.mxu0 0.0
    %v301 = vand.u32 %v105, 4294901760
    %v302 = vsub.f32 %v105, %v301
    %303 = vmatpush1.xpose.msra.mxu0 %v302
    %304 = vmatprep.subr.mxu0 0.0
    %305 = vmatpush2.xpose.msra.mxu0 0.0
    %306 = vmatprep.subr.mxu0 0.0
    %307 = vmatpush2.xpose.msra.mxu0 0.0
    %308 = vmatprep.subr.mxu0 0.0
    %309 = vmatpush2.xpose.msra.mxu0 0.0
    %310 = vmatprep.subr.mxu0 0.0
    %311 = vmatpush2.xpose.msra.mxu0 0.0
    %312 = vmatprep.subr.mxu0 0.0
    %313 = vmatpush2.xpose.msra.mxu0 0.0
    %314 = vmatprep.subr.mxu0 0.0
    %315 = vmatpush2.xpose.msra.mxu0 0.0
    %316 = vmatprep.subr.mxu0 0.0
    %317 = vmatpush2.xpose.msra.mxu0 0.0
    %318 = vmatprep.subr.mxu0 0.0
    %319 = vmatpush2.xpose.msra.mxu0 0.0
    %320 = vmatprep.subr.mxu0 0.0
    %321 = vmatpush2.xpose.msra.mxu0 0.0
    %322 = vmatprep.subr.mxu0 0.0
    %323 = vmatpush2.xpose.msra.mxu0 0.0
    %324 = vmatprep.subr.mxu0 0.0
    %325 = vmatpush2.xpose.msra.mxu0 0.0
    %326 = vmatprep.subr.mxu0 0.0
    %327 = vmatpush2.xpose.msra.mxu0 0.0
    %328 = vmatprep.subr.mxu0 0.0
    %329 = vmatpush2.xpose.msra.mxu0 0.0
    %330 = vmatprep.subr.mxu0 0.0
    %331 = vmatpush2.xpose.msra.mxu0 0.0
    %332 = vmatprep.subr.mxu0 0.0
    %333 = vmatpush2.xpose.msra.mxu0 0.0
    %334 = vmatprep.subr.mxu0 0.0
    %335 = vmatpush2.xpose.msra.mxu0 0.0
    %336 = vmatprep.mubr.f32.mxu0 0.0
    %v337 = vand.u32 %v102, 4294901760
    %v338 = vsub.f32 %v102, %v337
    %339 = vmatmul.mubr.f32.gmra.mxu0 %v338
    %v340 = vpop.f32.mrf.mxu0
    %v341 = vadd.f32 %v265, %v340
    %v342 = vpop.f32.mrf.mxu0
    %343 = vdwg.mxu0
    %344 = vmatprep.subr.mxu0 0.0
    %345 = vmatpush1.xpose.msra.mxu0 0.0
    %346 = vmatprep.subr.mxu0 0.0
    %347 = vmatpush1.xpose.msra.mxu0 0.0
    %348 = vmatprep.subr.mxu0 0.0
    %349 = vmatpush1.xpose.msra.mxu0 0.0
    %350 = vmatprep.subr.mxu0 0.0
    %351 = vmatpush1.xpose.msra.mxu0 0.0
    %352 = vmatprep.subr.mxu0 0.0
    %353 = vmatpush1.xpose.msra.mxu0 0.0
    %354 = vmatprep.subr.mxu0 0.0
    %355 = vmatpush1.xpose.msra.mxu0 0.0
    %356 = vmatprep.subr.mxu0 0.0
    %357 = vmatpush1.xpose.msra.mxu0 0.0
    %358 = vmatprep.subr.mxu0 0.0
    %359 = vmatpush1.xpose.msra.mxu0 0.0
    %360 = vmatprep.subr.mxu0 0.0
    %361 = vmatpush1.xpose.msra.mxu0 0.0
    %362 = vmatprep.subr.mxu0 0.0
    %363 = vmatpush1.xpose.msra.mxu0 0.0
    %364 = vmatprep.subr.mxu0 0.0
    %365 = vmatpush1.xpose.msra.mxu0 0.0
    %366 = vmatprep.subr.mxu0 0.0
    %367 = vmatpush1.xpose.msra.mxu0 0.0
    %368 = vmatprep.subr.mxu0 0.0
    %369 = vmatpush1.xpose.msra.mxu0 0.0
    %370 = vmatprep.subr.mxu0 0.0
    %371 = vmatpush1.xpose.msra.mxu0 0.0
    %372 = vmatprep.subr.mxu0 0.0
    %v373 = vand.u32 %v108, 4294901760
    %374 = vmatpush1.xpose.msra.mxu0 %v373
    %375 = vmatprep.subr.mxu0 0.0
    %v376 = vand.u32 %v105, 4294901760
    %377 = vmatpush1.xpose.msra.mxu0 %v376
    %378 = vmatprep.subr.mxu0 0.0
    %379 = vmatpush2.xpose.msra.mxu0 0.0
    %380 = vmatprep.subr.mxu0 0.0
    %381 = vmatpush2.xpose.msra.mxu0 0.0
    %382 = vmatprep.subr.mxu0 0.0
    %383 = vmatpush2.xpose.msra.mxu0 0.0
    %384 = vmatprep.subr.mxu0 0.0
    %385 = vmatpush2.xpose.msra.mxu0 0.0
    %386 = vmatprep.subr.mxu0 0.0
    %387 = vmatpush2.xpose.msra.mxu0 0.0
    %388 = vmatprep.subr.mxu0 0.0
    %389 = vmatpush2.xpose.msra.mxu0 0.0
    %390 = vmatprep.subr.mxu0 0.0
    %391 = vmatpush2.xpose.msra.mxu0 0.0
    %392 = vmatprep.subr.mxu0 0.0
    %393 = vmatpush2.xpose.msra.mxu0 0.0
    %394 = vmatprep.subr.mxu0 0.0
    %395 = vmatpush2.xpose.msra.mxu0 0.0
    %396 = vmatprep.subr.mxu0 0.0
    %397 = vmatpush2.xpose.msra.mxu0 0.0
    %398 = vmatprep.subr.mxu0 0.0
    %399 = vmatpush2.xpose.msra.mxu0 0.0
    %400 = vmatprep.subr.mxu0 0.0
    %401 = vmatpush2.xpose.msra.mxu0 0.0
    %402 = vmatprep.subr.mxu0 0.0
    %403 = vmatpush2.xpose.msra.mxu0 0.0
    %404 = vmatprep.subr.mxu0 0.0
    %405 = vmatpush2.xpose.msra.mxu0 0.0
    %406 = vmatprep.subr.mxu0 0.0
    %407 = vmatpush2.xpose.msra.mxu0 0.0
    %408 = vmatprep.subr.mxu0 0.0
    %409 = vmatpush2.xpose.msra.mxu0 0.0
    %410 = vmatprep.mubr.f32.mxu0 0.0
    %v411 = vand.u32 %v102, 4294901760
    %v412 = vsub.f32 %v102, %v411
    %v413 = vand.u32 %v412, 4294901760
    %414 = vmatmul.mubr.f32.gmra.mxu0 %v413
    %v415 = vpop.f32.mrf.mxu0
    %v416 = vadd.f32 %v341, %v415
    %v417 = vpop.f32.mrf.mxu0
    %418 = vdwg.mxu0
    %419 = vmatprep.subr.mxu0 0.0
    %420 = vmatpush1.xpose.msra.mxu0 0.0
    %421 = vmatprep.subr.mxu0 0.0
    %422 = vmatpush1.xpose.msra.mxu0 0.0
    %423 = vmatprep.subr.mxu0 0.0
    %424 = vmatpush1.xpose.msra.mxu0 0.0
    %425 = vmatprep.subr.mxu0 0.0
    %426 = vmatpush1.xpose.msra.mxu0 0.0
    %427 = vmatprep.subr.mxu0 0.0
    %428 = vmatpush1.xpose.msra.mxu0 0.0
    %429 = vmatprep.subr.mxu0 0.0
    %430 = vmatpush1.xpose.msra.mxu0 0.0
    %431 = vmatprep.subr.mxu0 0.0
    %432 = vmatpush1.xpose.msra.mxu0 0.0
    %433 = vmatprep.subr.mxu0 0.0
    %434 = vmatpush1.xpose.msra.mxu0 0.0
    %435 = vmatprep.subr.mxu0 0.0
    %436 = vmatpush1.xpose.msra.mxu0 0.0
    %437 = vmatprep.subr.mxu0 0.0
    %438 = vmatpush1.xpose.msra.mxu0 0.0
    %439 = vmatprep.subr.mxu0 0.0
    %440 = vmatpush1.xpose.msra.mxu0 0.0
    %441 = vmatprep.subr.mxu0 0.0
    %442 = vmatpush1.xpose.msra.mxu0 0.0
    %443 = vmatprep.subr.mxu0 0.0
    %444 = vmatpush1.xpose.msra.mxu0 0.0
    %445 = vmatprep.subr.mxu0 0.0
    %446 = vmatpush1.xpose.msra.mxu0 0.0
    %447 = vmatprep.subr.mxu0 0.0
    %v448 = vand.u32 %v108, 4294901760
    %v449 = vsub.f32 %v108, %v448
    %v450 = vand.u32 %v449, 4294901760
    %451 = vmatpush1.xpose.msra.mxu0 %v450
    %452 = vmatprep.subr.mxu0 0.0
    %v453 = vand.u32 %v105, 4294901760
    %v454 = vsub.f32 %v105, %v453
    %v455 = vand.u32 %v454, 4294901760
    %456 = vmatpush1.xpose.msra.mxu0 %v455
    %457 = vmatprep.subr.mxu0 0.0
    %458 = vmatpush2.xpose.msra.mxu0 0.0
    %459 = vmatprep.subr.mxu0 0.0
    %460 = vmatpush2.xpose.msra.mxu0 0.0
    %461 = vmatprep.subr.mxu0 0.0
    %462 = vmatpush2.xpose.msra.mxu0 0.0
    %463 = vmatprep.subr.mxu0 0.0
    %464 = vmatpush2.xpose.msra.mxu0 0.0
    %465 = vmatprep.subr.mxu0 0.0
    %466 = vmatpush2.xpose.msra.mxu0 0.0
    %467 = vmatprep.subr.mxu0 0.0
    %468 = vmatpush2.xpose.msra.mxu0 0.0
    %469 = vmatprep.subr.mxu0 0.0
    %470 = vmatpush2.xpose.msra.mxu0 0.0
    %471 = vmatprep.subr.mxu0 0.0
    %472 = vmatpush2.xpose.msra.mxu0 0.0
    %473 = vmatprep.subr.mxu0 0.0
    %474 = vmatpush2.xpose.msra.mxu0 0.0
    %475 = vmatprep.subr.mxu0 0.0
    %476 = vmatpush2.xpose.msra.mxu0 0.0
    %477 = vmatprep.subr.mxu0 0.0
    %478 = vmatpush2.xpose.msra.mxu0 0.0
    %479 = vmatprep.subr.mxu0 0.0
    %480 = vmatpush2.xpose.msra.mxu0 0.0
    %481 = vmatprep.subr.mxu0 0.0
    %482 = vmatpush2.xpose.msra.mxu0 0.0
    %483 = vmatprep.subr.mxu0 0.0
    %484 = vmatpush2.xpose.msra.mxu0 0.0
    %485 = vmatprep.subr.mxu0 0.0
    %486 = vmatpush2.xpose.msra.mxu0 0.0
    %487 = vmatprep.subr.mxu0 0.0
    %488 = vmatpush2.xpose.msra.mxu0 0.0
    %489 = vmatprep.mubr.f32.mxu0 0.0
    %v490 = vand.u32 %v102, 4294901760
    %491 = vmatmul.mubr.f32.gmra.mxu0 %v490
    %v492 = vpop.f32.mrf.mxu0
    %v493 = vadd.f32 %v416, %v492
    %v494 = vpop.f32.mrf.mxu0
    %495 = vdwg.mxu0
    %496 = vmatprep.subr.mxu0 0.0
    %497 = vmatpush1.xpose.msra.mxu0 0.0
    %498 = vmatprep.subr.mxu0 0.0
    %499 = vmatpush1.xpose.msra.mxu0 0.0
    %500 = vmatprep.subr.mxu0 0.0
    %501 = vmatpush1.xpose.msra.mxu0 0.0
    %502 = vmatprep.subr.mxu0 0.0
    %503 = vmatpush1.xpose.msra.mxu0 0.0
    %504 = vmatprep.subr.mxu0 0.0
    %505 = vmatpush1.xpose.msra.mxu0 0.0
    %506 = vmatprep.subr.mxu0 0.0
    %507 = vmatpush1.xpose.msra.mxu0 0.0
    %508 = vmatprep.subr.mxu0 0.0
    %509 = vmatpush1.xpose.msra.mxu0 0.0
    %510 = vmatprep.subr.mxu0 0.0
    %511 = vmatpush1.xpose.msra.mxu0 0.0
    %512 = vmatprep.subr.mxu0 0.0
    %513 = vmatpush1.xpose.msra.mxu0 0.0
    %514 = vmatprep.subr.mxu0 0.0
    %515 = vmatpush1.xpose.msra.mxu0 0.0
    %516 = vmatprep.subr.mxu0 0.0
    %517 = vmatpush1.xpose.msra.mxu0 0.0
    %518 = vmatprep.subr.mxu0 0.0
    %519 = vmatpush1.xpose.msra.mxu0 0.0
    %520 = vmatprep.subr.mxu0 0.0
    %521 = vmatpush1.xpose.msra.mxu0 0.0
    %522 = vmatprep.subr.mxu0 0.0
    %523 = vmatpush1.xpose.msra.mxu0 0.0
    %524 = vmatprep.subr.mxu0 0.0
    %v525 = vand.u32 %v108, 4294901760
    %526 = vmatpush1.xpose.msra.mxu0 %v525
    %527 = vmatprep.subr.mxu0 0.0
    %v528 = vand.u32 %v105, 4294901760
    %529 = vmatpush1.xpose.msra.mxu0 %v528
    %530 = vmatprep.subr.mxu0 0.0
    %531 = vmatpush2.xpose.msra.mxu0 0.0
    %532 = vmatprep.subr.mxu0 0.0
    %533 = vmatpush2.xpose.msra.mxu0 0.0
    %534 = vmatprep.subr.mxu0 0.0
    %535 = vmatpush2.xpose.msra.mxu0 0.0
    %536 = vmatprep.subr.mxu0 0.0
    %537 = vmatpush2.xpose.msra.mxu0 0.0
    %538 = vmatprep.subr.mxu0 0.0
    %539 = vmatpush2.xpose.msra.mxu0 0.0
    %540 = vmatprep.subr.mxu0 0.0
    %541 = vmatpush2.xpose.msra.mxu0 0.0
    %542 = vmatprep.subr.mxu0 0.0
    %543 = vmatpush2.xpose.msra.mxu0 0.0
    %544 = vmatprep.subr.mxu0 0.0
    %545 = vmatpush2.xpose.msra.mxu0 0.0
    %546 = vmatprep.subr.mxu0 0.0
    %547 = vmatpush2.xpose.msra.mxu0 0.0
    %548 = vmatprep.subr.mxu0 0.0
    %549 = vmatpush2.xpose.msra.mxu0 0.0
    %550 = vmatprep.subr.mxu0 0.0
    %551 = vmatpush2.xpose.msra.mxu0 0.0
    %552 = vmatprep.subr.mxu0 0.0
    %553 = vmatpush2.xpose.msra.mxu0 0.0
    %554 = vmatprep.subr.mxu0 0.0
    %555 = vmatpush2.xpose.msra.mxu0 0.0
    %556 = vmatprep.subr.mxu0 0.0
    %557 = vmatpush2.xpose.msra.mxu0 0.0
    %558 = vmatprep.subr.mxu0 0.0
    %559 = vmatpush2.xpose.msra.mxu0 0.0
    %560 = vmatprep.subr.mxu0 0.0
    %561 = vmatpush2.xpose.msra.mxu0 0.0
    %562 = vmatprep.mubr.f32.mxu0 0.0
    %v563 = vand.u32 %v102, 4294901760
    %564 = vmatmul.mubr.f32.gmra.mxu0 %v563
    %v565 = vpop.f32.mrf.mxu0
    %v566 = vadd.f32 %v493, %v565
    %v567 = vpop.f32.mrf.mxu0
    %568 = vdwg.mxu0
    %vm569 = vcmask 80896
    %570 = vst.msk [vmem:[#allocation11] sm:$0xff] %vm569, %v566
    %v571 = vsel %vm569, %v566, -inf
    %572 = vmax.xlane.f32.xlu0 %v571
    %v573 = vpop.xlane.xlu0 %572
    %v574 = vsub.f32 %v566, %v573
    %v575 = vmul.f32 %v574, 1.442695
    %v576 = vpow.pop %v575
    %v577 = vsel %vm569, %v576, 0.0
    %578 = vadd.xlane.f32.xlu0 %v577
    %v579 = vpop.xlane.xlu0 %578
    %v580 = vrcp.pop %v579
    %v581 = vmul.f32 %v576, %v580
    %582 = vst.msk [vmem:[#allocation13] sm:$0xff] %vm569, %v581
    %v583 = vlaneseq
    %v584 = vand.u32 %v583, 127
    %vm585 = vcmp.eq.f32.partialorder %v566, %v573
    %v586 = vsel %vm585, %v584, 10
    %v587 = vsel %vm569, %v586, 2147483647
    %v588 = vand.u32 %v587, 65535
    %v589 = vshra.s32 %v587, 16
    %v590 = vcvt.s32.f32 %v588
    %v591 = vcvt.s32.f32 %v589
    %592 = vmin.xlane.f32.xlu0 %v591
    %v593 = vpop.xlane.xlu0 %592
    %vm594 = vcmp.eq.f32.partialorder %v591, %v593
    %v595 = vsel %vm594, %v590, inf
    %596 = vmin.xlane.f32.xlu0 %v595
    %v597 = vpop.xlane.xlu0 %596
    %v598 = vcvt.f32.s32 %v597
    %v599 = vcvt.f32.s32 %v593
    %v600 = vshll.u32 %v599, 16
    %v601 = vadd.s32 %v600, %v598
    %vm602 = vcmask 7168
    %603 = vst.msk [vmem:[%s8] sm:$0xff] %vm602, %v601
    // Predicated region
    $region38: #{tpu_custom_call.1} parent=1 // pred_check
      _
    $region39: #{tpu_custom_call.1} parent=1 // pred_check_branch
      %605 = sbr.rel (0) target = $region41
    $region40: #{tpu_custom_call.1} parent=1 // pred_region
      %s607 = ssub.s32 128, 128
      %608 = vsyncadd [#allocation4], %s607
      %s610 = sshll.u32 [#allocation10], 4
      %s611 = int_to_ptr.vmem [resolvable:$true] %s610
      %613 = dma.vmem_to_hbm [thread:$0]  %s611, 128, %s5, [#allocation4]
    $region41: #{tpu_custom_call.1} parent=1 // pred_fallthru
      _
    // Predicated region
    $region42: #{tpu_custom_call.1} parent=1 // pred_check
      _
    $region43: #{tpu_custom_call.1} parent=1 // pred_check_branch
      %615 = sbr.rel (0) target = $region45
    $region44: #{tpu_custom_call.1} parent=1 // pred_region
      %s617 = ssub.s32 128, 128
      %618 = vsyncadd [#allocation12], %s617
      %s620 = sshll.u32 [#allocation11], 4
      %s621 = int_to_ptr.vmem [resolvable:$true] %s620
      %623 = dma.vmem_to_hbm [thread:$0]  %s621, 128, %s6, [#allocation12]
    $region45: #{tpu_custom_call.1} parent=1 // pred_fallthru
      _
    // Predicated region
    $region46: #{tpu_custom_call.1} parent=1 // pred_check
      _
    $region47: #{tpu_custom_call.1} parent=1 // pred_check_branch
      %625 = sbr.rel (0) target = $region49
    $region48: #{tpu_custom_call.1} parent=1 // pred_region
      %s627 = ssub.s32 128, 128
      %628 = vsyncadd [#allocation12], %s627
      %s630 = sshll.u32 [#allocation13], 4
      %s631 = int_to_ptr.vmem [resolvable:$true] %s630
      %633 = dma.vmem_to_hbm [thread:$0]  %s631, 128, %s7, [#allocation12]
    $region49: #{tpu_custom_call.1} parent=1 // pred_fallthru
      _
    // Predicated region
    $region50: #{tpu_custom_call.1} parent=1 // pred_check
      _
    $region51: #{tpu_custom_call.1} parent=1 // pred_check_branch
      %635 = sbr.rel (0) target = $region53
    $region52: #{tpu_custom_call.1} parent=1 // pred_region
      _
    $region53: #{tpu_custom_call.1} parent=1 // pred_fallthru
      _
    // Predicated region
    $region54: #{tpu_custom_call.1} parent=1 // pred_check
      _
    $region55: #{tpu_custom_call.1} parent=1 // pred_check_branch
      %637 = sbr.rel (0) target = $region57
    $region56: #{tpu_custom_call.1} parent=1 // pred_region
      %638 = dma.done [#allocation4], 128
    $region57: #{tpu_custom_call.1} parent=1 // pred_fallthru
      _
    // Predicated region
    $region58: #{tpu_custom_call.1} parent=1 // pred_check
      _
    $region59: #{tpu_custom_call.1} parent=1 // pred_check_branch
      %640 = sbr.rel (0) target = $region61
    $region60: #{tpu_custom_call.1} parent=1 // pred_region
      %641 = dma.done [#allocation12], 128
    $region61: #{tpu_custom_call.1} parent=1 // pred_fallthru
      _
    // Predicated region
    $region62: #{tpu_custom_call.1} parent=1 // pred_check
      _
    $region63: #{tpu_custom_call.1} parent=1 // pred_check_branch
      %643 = sbr.rel (0) target = $region65
    $region64: #{tpu_custom_call.1} parent=1 // pred_region
      %644 = dma.done [#allocation12], 128
    $region65: #{tpu_custom_call.1} parent=1 // pred_fallthru
      _
    // Predicated region
    $region66: #{tpu_custom_call.1} parent=1 // pred_check
      _
    $region67: #{tpu_custom_call.1} parent=1 // pred_check_branch
      %646 = sbr.rel (0) target = $region69
    $region68: #{tpu_custom_call.1} parent=1 // pred_region
      _
    $region69: #{tpu_custom_call.1} parent=1 // pred_fallthru
      _
    %647 = vsyncpa [#allocation3], 1
    %648 = vsyncpa [#allocation6], 1
    %649 = vsyncpa [#allocation9], 1
    %650 = vsyncpa [#allocation4], 1
    %651 = vsyncpa [#allocation12], 1

</llo_original>
